<compile_context>
chip_gen: v6e
topology: v6e:2x2x1
jax: 0.10.0
libtpu: 0.0.40
codegen_flags: <defaults>
</compile_context>

<pallas_src>
import jax
import jax.numpy as jnp
import numpy as np
from jax.experimental import pallas as pl
from jax.experimental.pallas import tpu as pltpu

_LANE = 128


def _round_up(x, m):
    return ((x + m - 1) // m) * m


# ---------------------------------------------------------------------------
# MADE mask construction (deterministic, natural ordering, cycling degrees)
# ---------------------------------------------------------------------------
def _made_degrees(n_features, hidden_sizes):
    d_in = np.arange(1, n_features + 1)
    degs = [d_in]
    for h in hidden_sizes:
        if n_features > 1:
            degs.append((np.arange(h) % (n_features - 1)) + 1)
        else:
            degs.append(np.ones(h, dtype=np.int64))
    return degs


def _made_masks(n_features, hidden_sizes, n_out_per_feature):
    degs = _made_degrees(n_features, hidden_sizes)
    masks = []
    # hidden-layer masks: M[i, j] = deg_out[j] >= deg_in[i]   (weights are [in, out])
    for l in range(len(hidden_sizes)):
        d_prev, d_cur = degs[l], degs[l + 1]
        masks.append((d_cur[None, :] >= d_prev[:, None]).astype(np.float32))
    # output mask: strict inequality; output degrees = input degrees tiled
    d_out = np.tile(degs[0], n_out_per_feature)
    d_last = degs[-1]
    masks.append((d_out[None, :] > d_last[:, None]).astype(np.float32))
    return masks


# ---------------------------------------------------------------------------
# Pallas kernel: masked MLP (2 hidden layers, ReLU), lane-padded shapes.
# Emits mu and log_sigma as two lane-dense outputs.
# ---------------------------------------------------------------------------
def made_mlp_kernel(z_ref, w1_ref, b1_ref, w2_ref, b2_ref, wo_ref, bo_ref,
                    mu_ref, ls_ref):
    z = z_ref[...]
    # bf16 (or f32) matmuls with f32 MXU accumulation; elementwise stays f32.
    h1 = jnp.dot(z, w1_ref[...], preferred_element_type=jnp.float32) + b1_ref[...]
    h1 = jnp.maximum(h1, 0.0).astype(w2_ref.dtype)
    h2 = jnp.dot(h1, w2_ref[...], preferred_element_type=jnp.float32) + b2_ref[...]
    h2 = jnp.maximum(h2, 0.0).astype(wo_ref.dtype)
    out = jnp.dot(h2, wo_ref[...], preferred_element_type=jnp.float32) + bo_ref[...]
    half = out.shape[-1] // 2          # static, lane-aligned split point
    mu_ref[...] = out[:, :half].astype(mu_ref.dtype)
    ls_ref[...] = out[:, half:].astype(ls_ref.dtype)


def flow_made_forward(z, prepared_params, n_features, *, block_m=1024):
    """FlowMade.forward: z [bs, n_features] -> (mu, log_sigma) each [bs, n_features].

    `prepared_params` are the lane-padded, mask-folded params from prepare_params().
    """
    (w1, b1), (w2, b2), (wo, bo) = prepared_params
    bs, feat = z.shape
    assert feat == n_features
    h1p = w1.shape[1]
    h2p = w2.shape[1]
    out2 = wo.shape[1]          # 2 * padded-output width
    outp = out2 // 2
    compute_dtype = w1.dtype

    # batch tiling: sublane-aligned tile, pad batch up to a multiple of it
    tm = min(block_m, max(8, _round_up(bs, 8)))
    bs_pad = _round_up(bs, tm)
    z_c = z.astype(compute_dtype)
    if bs_pad != bs:
        z_c = jnp.pad(z_c, ((0, bs_pad - bs), (0, 0)))
    grid = (bs_pad // tm,)

    flops = 2 * bs_pad * (feat * h1p + h1p * h2p + h2p * out2)
    param_bytes = sum(int(a.size) * a.dtype.itemsize
                      for a in (w1, b1, w2, b2, wo, bo))
    bytes_accessed = (int(z_c.size) * z_c.dtype.itemsize
                      + param_bytes
                      + 2 * bs_pad * outp * 4)

    mu_p, ls_p = pl.pallas_call(
        made_mlp_kernel,
        out_shape=(jax.ShapeDtypeStruct((bs_pad, outp), jnp.float32),
                   jax.ShapeDtypeStruct((bs_pad, outp), jnp.float32)),
        grid_spec=pltpu.PrefetchScalarGridSpec(
            num_scalar_prefetch=0,
            grid=grid,
            in_specs=[
                pl.BlockSpec((tm, feat), lambda i: (i, 0)),     # z tile (pipelined)
                pl.BlockSpec((feat, h1p), lambda i: (0, 0)),    # weights: resident
                pl.BlockSpec((1, h1p), lambda i: (0, 0)),
                pl.BlockSpec((h1p, h2p), lambda i: (0, 0)),
                pl.BlockSpec((1, h2p), lambda i: (0, 0)),
                pl.BlockSpec((h2p, out2), lambda i: (0, 0)),
                pl.BlockSpec((1, out2), lambda i: (0, 0)),
            ],
            out_specs=[
                pl.BlockSpec((tm, outp), lambda i: (i, 0)),     # mu tile
                pl.BlockSpec((tm, outp), lambda i: (i, 0)),     # log_sigma tile
            ],
        ),
        compiler_params=pltpu.CompilerParams(
            dimension_semantics=("parallel",),          # megacore on v7x
            vmem_limit_bytes=32 * 1024 * 1024,
        ),
        cost_estimate=pl.CostEstimate(
            flops=flops, transcendentals=0, bytes_accessed=bytes_accessed),
    )(z_c, w1, b1, w2, b2, wo, bo)

    # drop batch padding + lane padding (mu/log_sigma columns are already split)
    mu = mu_p[:bs, :n_features]
    log_sigma = ls_p[:bs, :n_features]
    return mu, log_sigma


# ---------------------------------------------------------------------------
# Parameter init (deterministic, logical shapes) + lane-padding / dtype prep
# ---------------------------------------------------------------------------
def init_params(key, n_features, hidden_sizes, n_out_per_feature=2):
    """Unpadded, mask-folded f32 params; weights stored [in, out]."""
    sizes = [n_features] + list(hidden_sizes) + [n_features * n_out_per_feature]
    masks = _made_masks(n_features, hidden_sizes, n_out_per_feature)
    params = []
    for i in range(len(sizes) - 1):
        key, kw, kb = jax.random.split(key, 3)
        fan_in, fan_out = sizes[i], sizes[i + 1]
        bound = 1.0 / np.sqrt(fan_in)
        w = jax.random.uniform(kw, (fan_in, fan_out), jnp.float32, -bound, bound)
        b = jax.random.uniform(kb, (1, fan_out), jnp.float32, -bound, bound)
        w = w * jnp.asarray(masks[i])  # fold autoregressive mask into weight
        params.append((w, b))
    return params


def prepare_params(params, n_features, *, compute_dtype=jnp.bfloat16, lane=_LANE):
    """Zero-pad hidden/output dims to lane width and cast weights to compute dtype.

    Output layout: columns [0:lane) hold mu (first n_features valid),
    columns [lane:2*lane) hold log_sigma (first n_features valid).
    Padding rows/cols are zero, so results are unchanged.
    """
    (w1, b1), (w2, b2), (wo, bo) = params
    f = n_features
    h1, h2 = w1.shape[1], w2.shape[1]
    h1p, h2p = _round_up(h1, lane), _round_up(h2, lane)
    outp = _round_up(f, lane)

    w1p = jnp.zeros((f, h1p), jnp.float32).at[:, :h1].set(w1)
    b1p = jnp.zeros((1, h1p), jnp.float32).at[:, :h1].set(b1)
    w2p = jnp.zeros((h1p, h2p), jnp.float32).at[:h1, :h2].set(w2)
    b2p = jnp.zeros((1, h2p), jnp.float32).at[:, :h2].set(b2)
    wop = jnp.zeros((h2p, 2 * outp), jnp.float32)
    wop = wop.at[:h2, :f].set(wo[:, :f])                    # mu half
    wop = wop.at[:h2, outp:outp + f].set(wo[:, f:])         # log_sigma half
    bop = jnp.zeros((1, 2 * outp), jnp.float32)
    bop = bop.at[:, :f].set(bo[:, :f])
    bop = bop.at[:, outp:outp + f].set(bo[:, f:])

    cast = lambda a: a.astype(compute_dtype)
    # weights in compute dtype (bf16 feeds the MXU), biases stay f32
    return ((cast(w1p), b1p), (cast(w2p), b2p), (cast(wop), bop))


# ---------------------------------------------------------------------------
# Pure-JAX references
# ---------------------------------------------------------------------------
def reference_forward_logical(z, params, n_features):
    """f32, unpadded — mirrors the original torch module exactly."""
    (w1, b1), (w2, b2), (wo, bo) = params
    h = jnp.maximum(z @ w1 + b1, 0.0)
    h = jnp.maximum(h @ w2 + b2, 0.0)
    out = h @ wo + bo
    return out[:, :n_features], out[:, n_features:]


def reference_forward_prepared(z, prepared_params, n_features):
    """Mirrors the kernel's exact dtype flow on the padded params."""
    (w1, b1), (w2, b2), (wo, bo) = prepared_params
    cd = w1.dtype
    zc = z.astype(cd)
    h1 = jnp.dot(zc, w1, preferred_element_type=jnp.float32) + b1
    h1 = jnp.maximum(h1, 0.0).astype(cd)
    h2 = jnp.dot(h1, w2, preferred_element_type=jnp.float32) + b2
    h2 = jnp.maximum(h2, 0.0).astype(cd)
    out = jnp.dot(h2, wo, preferred_element_type=jnp.float32) + bo
    half = out.shape[-1] // 2
    return out[:, :n_features], out[:, half:half + n_features]


if __name__ == "__main__":
    key = jax.random.PRNGKey(0)
    bs, n_features = 8, 8
    hidden_sizes = [32, 32]

    key, kz = jax.random.split(key)
    z = jax.random.normal(kz, (bs, n_features), jnp.float32)
    params = init_params(key, n_features, hidden_sizes)

    # --- f32 path: must match the unpadded logical reference (padding is exact)
    prep_f32 = prepare_params(params, n_features, compute_dtype=jnp.float32)
    mu, log_sigma = flow_made_forward(z, prep_f32, n_features)
    jax.block_until_ready((mu, log_sigma))
    mu_ref, ls_ref = reference_forward_logical(z, params, n_features)
    np.testing.assert_allclose(np.asarray(mu), np.asarray(mu_ref),
                               rtol=1e-5, atol=1e-5)
    np.testing.assert_allclose(np.asarray(log_sigma), np.asarray(ls_ref),
                               rtol=1e-5, atol=1e-5)

    # --- bf16 path (default for v6e/v7x): matches the same-dtype JAX reference
    prep_bf16 = prepare_params(params, n_features, compute_dtype=jnp.bfloat16)
    mu_b, ls_b = flow_made_forward(z, prep_bf16, n_features)
    jax.block_until_ready((mu_b, ls_b))
    mu_rb, ls_rb = reference_forward_prepared(z, prep_bf16, n_features)
    np.testing.assert_allclose(np.asarray(mu_b), np.asarray(mu_rb),
                               rtol=1e-4, atol=1e-4)
    np.testing.assert_allclose(np.asarray(ls_b), np.asarray(ls_rb),
                               rtol=1e-4, atol=1e-4)

    print("KERNEL_OK")
</pallas_src>

<mosaic_0001>
module attributes {stable_mosaic.version = 11 : i64} {
  func.func @made_mlp_kernel(%arg0: i32, %arg1: memref<8x8xf32, #tpu.memory_space<vmem>>, %arg2: memref<8x128xf32, #tpu.memory_space<vmem>>, %arg3: memref<1x128xf32, #tpu.memory_space<vmem>>, %arg4: memref<128x128xf32, #tpu.memory_space<vmem>>, %arg5: memref<1x128xf32, #tpu.memory_space<vmem>>, %arg6: memref<128x256xf32, #tpu.memory_space<vmem>>, %arg7: memref<1x256xf32, #tpu.memory_space<vmem>>, %arg8: memref<8x128xf32, #tpu.memory_space<vmem>>, %arg9: memref<8x128xf32, #tpu.memory_space<vmem>>) attributes {dimension_semantics = [#tpu.dimension_semantics<parallel>], iteration_bounds = array<i64: 1>, scalar_prefetch = 0 : i64, scratch_operands = 0 : i64, tpu.core_type = #tpu.core_type<tc>, window_params = [{transform_indices = @transform_0, window_bounds = array<i64: 8, 8>}, {pipeline_mode = #tpu.pipeline_mode<synchronous>, transform_indices = @transform_1, window_bounds = array<i64: 8, 128>}, {pipeline_mode = #tpu.pipeline_mode<synchronous>, transform_indices = @transform_2, window_bounds = array<i64: 1, 128>}, {pipeline_mode = #tpu.pipeline_mode<synchronous>, transform_indices = @transform_3, window_bounds = array<i64: 128, 128>}, {pipeline_mode = #tpu.pipeline_mode<synchronous>, transform_indices = @transform_4, window_bounds = array<i64: 1, 128>}, {pipeline_mode = #tpu.pipeline_mode<synchronous>, transform_indices = @transform_5, window_bounds = array<i64: 128, 256>}, {pipeline_mode = #tpu.pipeline_mode<synchronous>, transform_indices = @transform_6, window_bounds = array<i64: 1, 256>}, {transform_indices = @transform_7, window_bounds = array<i64: 8, 128>}, {transform_indices = @transform_8, window_bounds = array<i64: 8, 128>}]} {
    %c0 = arith.constant 0 : index
    %c0_0 = arith.constant 0 : index
    %0 = vector.load %arg1[%c0, %c0_0] : memref<8x8xf32, #tpu.memory_space<vmem>>, vector<8x8xf32>
    %c0_1 = arith.constant 0 : index
    %c0_2 = arith.constant 0 : index
    %1 = vector.load %arg2[%c0_1, %c0_2] : memref<8x128xf32, #tpu.memory_space<vmem>>, vector<8x128xf32>
    %cst = arith.constant dense<0.000000e+00> : vector<8x128xf32>
    %2 = tpu.matmul %0, %1, %cst {dimension_numbers = #tpu.dot_dimension_numbers<[1], [0], [0], [1], [0, 0, 1, 1], [], []>} : vector<8x8xf32>, vector<8x128xf32>, vector<8x128xf32> -> vector<8x128xf32>
    %c0_3 = arith.constant 0 : index
    %c0_4 = arith.constant 0 : index
    %3 = vector.load %arg3[%c0_3, %c0_4] : memref<1x128xf32, #tpu.memory_space<vmem>>, vector<1x128xf32>
    %4 = vector.broadcast %3 : vector<1x128xf32> to vector<8x128xf32>
    %5 = arith.addf %2, %4 : vector<8x128xf32>
    %cst_5 = arith.constant 0.000000e+00 : f32
    %6 = vector.broadcast %cst_5 : f32 to vector<8x128xf32>
    %7 = arith.maximumf %5, %6 : vector<8x128xf32>
    %c0_6 = arith.constant 0 : index
    %c0_7 = arith.constant 0 : index
    %8 = vector.load %arg4[%c0_6, %c0_7] : memref<128x128xf32, #tpu.memory_space<vmem>>, vector<128x128xf32>
    %cst_8 = arith.constant dense<0.000000e+00> : vector<8x128xf32>
    %9 = tpu.matmul %7, %8, %cst_8 {dimension_numbers = #tpu.dot_dimension_numbers<[1], [0], [0], [1], [0, 0, 1, 1], [], []>} : vector<8x128xf32>, vector<128x128xf32>, vector<8x128xf32> -> vector<8x128xf32>
    %c0_9 = arith.constant 0 : index
    %c0_10 = arith.constant 0 : index
    %10 = vector.load %arg5[%c0_9, %c0_10] : memref<1x128xf32, #tpu.memory_space<vmem>>, vector<1x128xf32>
    %11 = vector.broadcast %10 : vector<1x128xf32> to vector<8x128xf32>
    %12 = arith.addf %9, %11 : vector<8x128xf32>
    %cst_11 = arith.constant 0.000000e+00 : f32
    %13 = vector.broadcast %cst_11 : f32 to vector<8x128xf32>
    %14 = arith.maximumf %12, %13 : vector<8x128xf32>
    %c0_12 = arith.constant 0 : index
    %c0_13 = arith.constant 0 : index
    %15 = vector.load %arg6[%c0_12, %c0_13] : memref<128x256xf32, #tpu.memory_space<vmem>>, vector<128x256xf32>
    %cst_14 = arith.constant dense<0.000000e+00> : vector<8x256xf32>
    %16 = tpu.matmul %14, %15, %cst_14 {dimension_numbers = #tpu.dot_dimension_numbers<[1], [0], [0], [1], [0, 0, 1, 1], [], []>} : vector<8x128xf32>, vector<128x256xf32>, vector<8x256xf32> -> vector<8x256xf32>
    %c0_15 = arith.constant 0 : index
    %c0_16 = arith.constant 0 : index
    %17 = vector.load %arg7[%c0_15, %c0_16] : memref<1x256xf32, #tpu.memory_space<vmem>>, vector<1x256xf32>
    %18 = vector.broadcast %17 : vector<1x256xf32> to vector<8x256xf32>
    %19 = arith.addf %16, %18 : vector<8x256xf32>
    %20 = vector.extract_strided_slice %19 {offsets = [0, 0], sizes = [8, 128], strides = [1, 1]} : vector<8x256xf32> to vector<8x128xf32>
    %c0_17 = arith.constant 0 : index
    %c0_18 = arith.constant 0 : index
    %21 = vector.load %arg8[%c0_17, %c0_18] : memref<8x128xf32, #tpu.memory_space<vmem>>, vector<8x128xf32>
    tpu.vector_store %arg8[%c0_17, %c0_18], %20 {strides = array<i32>} : memref<8x128xf32, #tpu.memory_space<vmem>>, vector<8x128xf32>,
    %22 = vector.extract_strided_slice %19 {offsets = [0, 128], sizes = [8, 128], strides = [1, 1]} : vector<8x256xf32> to vector<8x128xf32>
    %c0_19 = arith.constant 0 : index
    %c0_20 = arith.constant 0 : index
    %23 = vector.load %arg9[%c0_19, %c0_20] : memref<8x128xf32, #tpu.memory_space<vmem>>, vector<8x128xf32>
    tpu.vector_store %arg9[%c0_19, %c0_20], %22 {strides = array<i32>} : memref<8x128xf32, #tpu.memory_space<vmem>>, vector<8x128xf32>,
    return
  }
  func.func @transform_0(%arg0: i32) -> (i32, i32) {
    %c0_i32 = arith.constant 0 : i32
    %c0_i32_0 = arith.constant 0 : i32
    return %arg0, %c0_i32 : i32, i32
  }
  func.func @transform_1(%arg0: i32) -> (i32, i32) {
    %c0_i32 = arith.constant 0 : i32
    %c0_i32_0 = arith.constant 0 : i32
    %c0_i32_1 = arith.constant 0 : i32
    return %c0_i32, %c0_i32_0 : i32, i32
  }
  func.func @transform_2(%arg0: i32) -> (i32, i32) {
    %c0_i32 = arith.constant 0 : i32
    %c0_i32_0 = arith.constant 0 : i32
    %c0_i32_1 = arith.constant 0 : i32
    return %c0_i32, %c0_i32_0 : i32, i32
  }
  func.func @transform_3(%arg0: i32) -> (i32, i32) {
    %c0_i32 = arith.constant 0 : i32
    %c0_i32_0 = arith.constant 0 : i32
    %c0_i32_1 = arith.constant 0 : i32
    return %c0_i32, %c0_i32_0 : i32, i32
  }
  func.func @transform_4(%arg0: i32) -> (i32, i32) {
    %c0_i32 = arith.constant 0 : i32
    %c0_i32_0 = arith.constant 0 : i32
    %c0_i32_1 = arith.constant 0 : i32
    return %c0_i32, %c0_i32_0 : i32, i32
  }
  func.func @transform_5(%arg0: i32) -> (i32, i32) {
    %c0_i32 = arith.constant 0 : i32
    %c0_i32_0 = arith.constant 0 : i32
    %c0_i32_1 = arith.constant 0 : i32
    return %c0_i32, %c0_i32_0 : i32, i32
  }
  func.func @transform_6(%arg0: i32) -> (i32, i32) {
    %c0_i32 = arith.constant 0 : i32
    %c0_i32_0 = arith.constant 0 : i32
    %c0_i32_1 = arith.constant 0 : i32
    return %c0_i32, %c0_i32_0 : i32, i32
  }
  func.func @transform_7(%arg0: i32) -> (i32, i32) {
    %c0_i32 = arith.constant 0 : i32
    %c0_i32_0 = arith.constant 0 : i32
    return %arg0, %c0_i32 : i32, i32
  }
  func.func @transform_8(%arg0: i32) -> (i32, i32) {
    %c0_i32 = arith.constant 0 : i32
    %c0_i32_0 = arith.constant 0 : i32
    return %arg0, %c0_i32 : i32, i32
  }
}

</mosaic_0001>

<llo_original>
// kernel: tpu_custom_call.1
$region0: #{tpu_custom_call.1}
  #allocation0 [shape = 'u32[]', space=smem, size = 0x4, offset = 0x4, fixed_abs, tag = 'smem constant byte address 0x4 - core index']
  #allocation1 [shape = 'u32[144,128]{1,0:T(1,128)}', space=vmem, size = 0x12000, scoped, tag = 'internal scratch']
  %s0 = inlined_call_operand.hbm [shape: f32[8,8], index: 0, kind: input, shape index: {}]
  %s1 = inlined_call_operand.hbm [shape: f32[8,128], index: 1, kind: input, shape index: {}]
  %s2 = inlined_call_operand.vmem [shape: f32[1,128], index: 2, kind: input, shape index: {}]
  %s3 = inlined_call_operand.hbm [shape: f32[128,128], index: 3, kind: input, shape index: {}]
  %s4 = inlined_call_operand.vmem [shape: f32[1,128], index: 4, kind: input, shape index: {}]
  %s5 = inlined_call_operand.hbm [shape: f32[128,256], index: 5, kind: input, shape index: {}]
  %s6 = inlined_call_operand.vmem [shape: f32[1,256], index: 6, kind: input, shape index: {}]
  %s7 = inlined_call_operand.hbm [shape: f32[8,128], index: 7, kind: output, shape index: {0}]
  %s8 = inlined_call_operand.hbm [shape: f32[8,128], index: 8, kind: output, shape index: {1}]
  %9 = xla_tuple %s7, %s8
  %s10 = sld [smem:[#allocation0]]
  $region62: #{tpu_custom_call.1} parent=0
    _
  %s12 = ssub.s32 1, %s10
  %s13 = scalar_select 0, %s12, %s10
  $region1: #{tpu_custom_call.1} parent=0
    #allocation2 [shape = 'u8[4096]{0}', space=vmem, size = 0x1000, scoped, tag = 'input window, operand 0, single buffered']
    #allocation3 [shape = 's32[1]{0}', space=sflag, size = 0x4, scoped, tag = 'scoped memory for tpu_custom_call.1']
    #allocation4 [shape = 's32[1]{0}', space=sflag, size = 0x4, scoped, tag = 'scoped memory for tpu_custom_call.1']
    #allocation5 [shape = 'u8[4096]{0}', space=vmem, size = 0x1000, scoped, tag = 'input window, operand 1, single buffered']
    #allocation6 [shape = 's32[1]{0}', space=sflag, size = 0x4, scoped, tag = 'scoped memory for tpu_custom_call.1']
    #allocation7 [shape = 'u8[65536]{0}', space=vmem, size = 0x10000, scoped, tag = 'input window, operand 3, single buffered']
    #allocation8 [shape = 'u8[131072]{0}', space=vmem, size = 0x20000, scoped, tag = 'input window, operand 5, single buffered']
    #allocation9 [shape = 's32[1]{0}', space=sflag, size = 0x4, scoped, tag = 'scoped memory for tpu_custom_call.1']
    #allocation10 [shape = 'u8[4096]{0}', space=vmem, size = 0x1000, scoped, tag = 'output window, operand 0, single buffered']
    #allocation11 [shape = 'u8[4096]{0}', space=vmem, size = 0x1000, scoped, tag = 'output window, operand 1, single buffered']
    #allocation12 [shape = 's32[1]{0}', space=sflag, size = 0x4, scoped, tag = 'scoped memory for tpu_custom_call.1']
    %14 = vsyncpa [#allocation3], 0
    %15 = vsyncpa [#allocation6], 0
    %16 = vsyncpa [#allocation9], 0
    %17 = vsyncpa [#allocation4], 0
    %18 = vsyncpa [#allocation12], 0
    // Predicated region
    $region2: #{tpu_custom_call.1} parent=1 // pred_check
      _
    $region3: #{tpu_custom_call.1} parent=1 // pred_check_branch
      %20 = sbr.rel (0) target = $region5
    $region4: #{tpu_custom_call.1} parent=1 // pred_region
      %s22 = ssub.s32 128, 128
      %23 = vsyncadd [#allocation3], %s22
      %s25 = sshll.u32 [#allocation2], 4
      %s26 = int_to_ptr.vmem [resolvable:$true] %s25
      %28 = dma.hbm_to_vmem [thread:$0]  %s0, 128, %s26, [#allocation3]
    $region5: #{tpu_custom_call.1} parent=1 // pred_fallthru
      _
    // Predicated region
    $region6: #{tpu_custom_call.1} parent=1 // pred_check
      _
    $region7: #{tpu_custom_call.1} parent=1 // pred_check_branch
      %30 = sbr.rel (0) target = $region9
    $region8: #{tpu_custom_call.1} parent=1 // pred_region
      %s32 = ssub.s32 128, 128
      %33 = vsyncadd [#allocation6], %s32
      %s35 = sshll.u32 [#allocation5], 4
      %s36 = int_to_ptr.vmem [resolvable:$true] %s35
      %38 = dma.hbm_to_vmem [thread:$0]  %s1, 128, %s36, [#allocation6]
    $region9: #{tpu_custom_call.1} parent=1 // pred_fallthru
      _
    // Predicated region
    $region10: #{tpu_custom_call.1} parent=1 // pred_check
      _
    $region11: #{tpu_custom_call.1} parent=1 // pred_check_branch
      %40 = sbr.rel (0) target = $region13
    $region12: #{tpu_custom_call.1} parent=1 // pred_region
      _
    $region13: #{tpu_custom_call.1} parent=1 // pred_fallthru
      _
    // Predicated region
    $region14: #{tpu_custom_call.1} parent=1 // pred_check
      _
    $region15: #{tpu_custom_call.1} parent=1 // pred_check_branch
      %42 = sbr.rel (0) target = $region17
    $region16: #{tpu_custom_call.1} parent=1 // pred_region
      %s44 = ssub.s32 2048, 2048
      %45 = vsyncadd [#allocation6], %s44
      %s46 = sshll.u32 [#allocation7], 4
      %s47 = int_to_ptr.vmem [resolvable:$true] %s46
      %52 = dma.hbm_to_vmem [thread:$0]  %s3, 2048, %s47, [#allocation6], 128, 128, 8
    $region17: #{tpu_custom_call.1} parent=1 // pred_fallthru
      _
    // Predicated region
    $region18: #{tpu_custom_call.1} parent=1 // pred_check
      _
    $region19: #{tpu_custom_call.1} parent=1 // pred_check_branch
      %54 = sbr.rel (0) target = $region21
    $region20: #{tpu_custom_call.1} parent=1 // pred_region
      _
    $region21: #{tpu_custom_call.1} parent=1 // pred_fallthru
      _
    // Predicated region
    $region22: #{tpu_custom_call.1} parent=1 // pred_check
      _
    $region23: #{tpu_custom_call.1} parent=1 // pred_check_branch
      %56 = sbr.rel (0) target = $region25
    $region24: #{tpu_custom_call.1} parent=1 // pred_region
      %s58 = ssub.s32 4096, 4096
      %59 = vsyncadd [#allocation9], %s58
      %s60 = sshll.u32 [#allocation8], 4
      %s61 = int_to_ptr.vmem [resolvable:$true] %s60
      %66 = dma.hbm_to_vmem [thread:$0]  %s5, 4096, %s61, [#allocation9], 256, 256, 16
    $region25: #{tpu_custom_call.1} parent=1 // pred_fallthru
      _
    // Predicated region
    $region26: #{tpu_custom_call.1} parent=1 // pred_check
      _
    $region27: #{tpu_custom_call.1} parent=1 // pred_check_branch
      %68 = sbr.rel (0) target = $region29
    $region28: #{tpu_custom_call.1} parent=1 // pred_region
      _
    $region29: #{tpu_custom_call.1} parent=1 // pred_fallthru
      _
    // Predicated region
    $region30: #{tpu_custom_call.1} parent=1 // pred_check
      _
    $region31: #{tpu_custom_call.1} parent=1 // pred_check_branch
      %70 = sbr.rel (0) target = $region33
    $region32: #{tpu_custom_call.1} parent=1 // pred_region
      %71 = dma.done [#allocation3], 128
    $region33: #{tpu_custom_call.1} parent=1 // pred_fallthru
      _
    // Predicated region
    $region34: #{tpu_custom_call.1} parent=1 // pred_check
      _
    $region35: #{tpu_custom_call.1} parent=1 // pred_check_branch
      %73 = sbr.rel (0) target = $region37
    $region36: #{tpu_custom_call.1} parent=1 // pred_region
      %74 = dma.done [#allocation6], 128
    $region37: #{tpu_custom_call.1} parent=1 // pred_fallthru
      _
    // Predicated region
    $region38: #{tpu_custom_call.1} parent=1 // pred_check
      _
    $region39: #{tpu_custom_call.1} parent=1 // pred_check_branch
      %76 = sbr.rel (0) target = $region41
    $region40: #{tpu_custom_call.1} parent=1 // pred_region
      %77 = dma.done [#allocation6], 2048
    $region41: #{tpu_custom_call.1} parent=1 // pred_fallthru
      _
    // Predicated region
    $region42: #{tpu_custom_call.1} parent=1 // pred_check
      _
    $region43: #{tpu_custom_call.1} parent=1 // pred_check_branch
      %79 = sbr.rel (0) target = $region45
    $region44: #{tpu_custom_call.1} parent=1 // pred_region
      %80 = dma.done [#allocation9], 4096
    $region45: #{tpu_custom_call.1} parent=1 // pred_fallthru
      _
    %v81 = vld [vmem:[#allocation2] sm:$0xff]
    %v82 = vld [vmem:[#allocation5] sm:$0xff]
    %v83 = vld [vmem:[%s2] sm:$0x1]
    %v85 = vlaneseq
    %v86 = vshrl.u32 %v85, 7
    %v87 = vsub.s32 0, %v86
    %v88 = vrot.slane %v83, %v87
    %vm90 = vcmask 64512
    %v92 = vsel %vm90, %v81, 0
    %94 = vmatprep.subr.mxu0 0.0
    %95 = vmatpush1.msra.mxu0 0.0
    %96 = vmatprep.subr.mxu0 0.0
    %97 = vmatpush1.msra.mxu0 0.0
    %98 = vmatprep.subr.mxu0 0.0
    %99 = vmatpush1.msra.mxu0 0.0
    %100 = vmatprep.subr.mxu0 0.0
    %101 = vmatpush1.msra.mxu0 0.0
    %102 = vmatprep.subr.mxu0 0.0
    %103 = vmatpush1.msra.mxu0 0.0
    %104 = vmatprep.subr.mxu0 0.0
    %105 = vmatpush1.msra.mxu0 0.0
    %106 = vmatprep.subr.mxu0 0.0
    %107 = vmatpush1.msra.mxu0 0.0
    %108 = vmatprep.subr.mxu0 0.0
    %109 = vmatpush1.msra.mxu0 0.0
    %110 = vmatprep.subr.mxu0 0.0
    %111 = vmatpush1.msra.mxu0 0.0
    %112 = vmatprep.subr.mxu0 0.0
    %113 = vmatpush1.msra.mxu0 0.0
    %114 = vmatprep.subr.mxu0 0.0
    %115 = vmatpush1.msra.mxu0 0.0
    %116 = vmatprep.subr.mxu0 0.0
    %117 = vmatpush1.msra.mxu0 0.0
    %118 = vmatprep.subr.mxu0 0.0
    %119 = vmatpush1.msra.mxu0 0.0
    %120 = vmatprep.subr.mxu0 0.0
    %121 = vmatpush1.msra.mxu0 0.0
    %122 = vmatprep.subr.mxu0 0.0
    %123 = vmatpush1.msra.mxu0 0.0
    %124 = vmatprep.subr.mxu0 0.0
    %125 = vmatpush1.msra.mxu0 %v82
    %126 = vmatprep.subr.mxu0 0.0
    %127 = vmatpush2.msra.mxu0 0.0
    %128 = vmatprep.subr.mxu0 0.0
    %129 = vmatpush2.msra.mxu0 0.0
    %130 = vmatprep.subr.mxu0 0.0
    %131 = vmatpush2.msra.mxu0 0.0
    %132 = vmatprep.subr.mxu0 0.0
    %133 = vmatpush2.msra.mxu0 0.0
    %134 = vmatprep.subr.mxu0 0.0
    %135 = vmatpush2.msra.mxu0 0.0
    %136 = vmatprep.subr.mxu0 0.0
    %137 = vmatpush2.msra.mxu0 0.0
    %138 = vmatprep.subr.mxu0 0.0
    %139 = vmatpush2.msra.mxu0 0.0
    %140 = vmatprep.subr.mxu0 0.0
    %141 = vmatpush2.msra.mxu0 0.0
    %142 = vmatprep.subr.mxu0 0.0
    %143 = vmatpush2.msra.mxu0 0.0
    %144 = vmatprep.subr.mxu0 0.0
    %145 = vmatpush2.msra.mxu0 0.0
    %146 = vmatprep.subr.mxu0 0.0
    %147 = vmatpush2.msra.mxu0 0.0
    %148 = vmatprep.subr.mxu0 0.0
    %149 = vmatpush2.msra.mxu0 0.0
    %150 = vmatprep.subr.mxu0 0.0
    %151 = vmatpush2.msra.mxu0 0.0
    %152 = vmatprep.subr.mxu0 0.0
    %153 = vmatpush2.msra.mxu0 0.0
    %154 = vmatprep.subr.mxu0 0.0
    %155 = vmatpush2.msra.mxu0 0.0
    %156 = vmatprep.subr.mxu0 0.0
    %157 = vmatpush2.msra.mxu0 0.0
    %158 = vmatprep.mubr.f32.mxu0 0.0
    %159 = vmatmul.mubr.f32.gmra.mxu0 %v92
    %v160 = vpop.f32.mrf.mxu0
    %v161 = vadd.f32 %v88, %v160
    %v162 = vpop.f32.mrf.mxu0
    %163 = vdwg.mxu0
    %v164 = vmax.f32 %v161, 0.0
    %v165 = vld [vmem:[#allocation7] sm:$0xff]
    %v166 = vld [vmem:[#allocation7 + $0x8] sm:$0xff]
    %v167 = vld [vmem:[#allocation7 + $0x10] sm:$0xff]
    %v168 = vld [vmem:[#allocation7 + $0x18] sm:$0xff]
    %v169 = vld [vmem:[#allocation7 + $0x20] sm:$0xff]
    %v170 = vld [vmem:[#allocation7 + $0x28] sm:$0xff]
    %v171 = vld [vmem:[#allocation7 + $0x30] sm:$0xff]
    %v172 = vld [vmem:[#allocation7 + $0x38] sm:$0xff]
    %v173 = vld [vmem:[#allocation7 + $0x40] sm:$0xff]
    %v174 = vld [vmem:[#allocation7 + $0x48] sm:$0xff]
    %v175 = vld [vmem:[#allocation7 + $0x50] sm:$0xff]
    %v176 = vld [vmem:[#allocation7 + $0x58] sm:$0xff]
    %v177 = vld [vmem:[#allocation7 + $0x60] sm:$0xff]
    %v178 = vld [vmem:[#allocation7 + $0x68] sm:$0xff]
    %v179 = vld [vmem:[#allocation7 + $0x70] sm:$0xff]
    %v180 = vld [vmem:[#allocation7 + $0x78] sm:$0xff]
    %v181 = vld [vmem:[%s4] sm:$0x1]
    %v183 = vlaneseq
    %v184 = vshrl.u32 %v183, 7
    %v185 = vsub.s32 0, %v184
    %v186 = vrot.slane %v181, %v185
    %188 = vmatprep.subr.mxu0 0.0
    %189 = vmatpush1.msra.mxu0 %v180
    %190 = vmatprep.subr.mxu0 0.0
    %191 = vmatpush1.msra.mxu0 %v179
    %192 = vmatprep.subr.mxu0 0.0
    %193 = vmatpush1.msra.mxu0 %v178
    %194 = vmatprep.subr.mxu0 0.0
    %195 = vmatpush1.msra.mxu0 %v177
    %196 = vmatprep.subr.mxu0 0.0
    %197 = vmatpush1.msra.mxu0 %v176
    %198 = vmatprep.subr.mxu0 0.0
    %199 = vmatpush1.msra.mxu0 %v175
    %200 = vmatprep.subr.mxu0 0.0
    %201 = vmatpush1.msra.mxu0 %v174
    %202 = vmatprep.subr.mxu0 0.0
    %203 = vmatpush1.msra.mxu0 %v173
    %204 = vmatprep.subr.mxu0 0.0
    %205 = vmatpush1.msra.mxu0 %v172
    %206 = vmatprep.subr.mxu0 0.0
    %207 = vmatpush1.msra.mxu0 %v171
    %208 = vmatprep.subr.mxu0 0.0
    %209 = vmatpush1.msra.mxu0 %v170
    %210 = vmatprep.subr.mxu0 0.0
    %211 = vmatpush1.msra.mxu0 %v169
    %212 = vmatprep.subr.mxu0 0.0
    %213 = vmatpush1.msra.mxu0 %v168
    %214 = vmatprep.subr.mxu0 0.0
    %215 = vmatpush1.msra.mxu0 %v167
    %216 = vmatprep.subr.mxu0 0.0
    %217 = vmatpush1.msra.mxu0 %v166
    %218 = vmatprep.subr.mxu0 0.0
    %219 = vmatpush1.msra.mxu0 %v165
    %220 = vmatprep.subr.mxu0 0.0
    %221 = vmatpush2.msra.mxu0 0.0
    %222 = vmatprep.subr.mxu0 0.0
    %223 = vmatpush2.msra.mxu0 0.0
    %224 = vmatprep.subr.mxu0 0.0
    %225 = vmatpush2.msra.mxu0 0.0
    %226 = vmatprep.subr.mxu0 0.0
    %227 = vmatpush2.msra.mxu0 0.0
    %228 = vmatprep.subr.mxu0 0.0
    %229 = vmatpush2.msra.mxu0 0.0
    %230 = vmatprep.subr.mxu0 0.0
    %231 = vmatpush2.msra.mxu0 0.0
    %232 = vmatprep.subr.mxu0 0.0
    %233 = vmatpush2.msra.mxu0 0.0
    %234 = vmatprep.subr.mxu0 0.0
    %235 = vmatpush2.msra.mxu0 0.0
    %236 = vmatprep.subr.mxu0 0.0
    %237 = vmatpush2.msra.mxu0 0.0
    %238 = vmatprep.subr.mxu0 0.0
    %239 = vmatpush2.msra.mxu0 0.0
    %240 = vmatprep.subr.mxu0 0.0
    %241 = vmatpush2.msra.mxu0 0.0
    %242 = vmatprep.subr.mxu0 0.0
    %243 = vmatpush2.msra.mxu0 0.0
    %244 = vmatprep.subr.mxu0 0.0
    %245 = vmatpush2.msra.mxu0 0.0
    %246 = vmatprep.subr.mxu0 0.0
    %247 = vmatpush2.msra.mxu0 0.0
    %248 = vmatprep.subr.mxu0 0.0
    %249 = vmatpush2.msra.mxu0 0.0
    %250 = vmatprep.subr.mxu0 0.0
    %251 = vmatpush2.msra.mxu0 0.0
    %252 = vmatprep.mubr.f32.mxu0 0.0
    %253 = vmatmul.mubr.f32.gmra.mxu0 %v164
    %v254 = vpop.f32.mrf.mxu0
    %v255 = vadd.f32 %v186, %v254
    %v256 = vpop.f32.mrf.mxu0
    %257 = vdwg.mxu0
    %v258 = vmax.f32 %v255, 0.0
    %v259 = vld [vmem:[#allocation8] sm:$0xff]
    %v260 = vld [vmem:[#allocation8 + $0x8] sm:$0xff]
    %v261 = vld [vmem:[#allocation8 + $0x10] sm:$0xff]
    %v262 = vld [vmem:[#allocation8 + $0x18] sm:$0xff]
    %v263 = vld [vmem:[#allocation8 + $0x20] sm:$0xff]
    %v264 = vld [vmem:[#allocation8 + $0x28] sm:$0xff]
    %v265 = vld [vmem:[#allocation8 + $0x30] sm:$0xff]
    %v266 = vld [vmem:[#allocation8 + $0x38] sm:$0xff]
    %v267 = vld [vmem:[#allocation8 + $0x40] sm:$0xff]
    %v268 = vld [vmem:[#allocation8 + $0x48] sm:$0xff]
    %v269 = vld [vmem:[#allocation8 + $0x50] sm:$0xff]
    %v270 = vld [vmem:[#allocation8 + $0x58] sm:$0xff]
    %v271 = vld [vmem:[#allocation8 + $0x60] sm:$0xff]
    %v272 = vld [vmem:[#allocation8 + $0x68] sm:$0xff]
    %v273 = vld [vmem:[#allocation8 + $0x70] sm:$0xff]
    %v274 = vld [vmem:[#allocation8 + $0x78] sm:$0xff]
    %v275 = vld [vmem:[#allocation8 + $0x80] sm:$0xff]
    %v276 = vld [vmem:[#allocation8 + $0x88] sm:$0xff]
    %v277 = vld [vmem:[#allocation8 + $0x90] sm:$0xff]
    %v278 = vld [vmem:[#allocation8 + $0x98] sm:$0xff]
    %v279 = vld [vmem:[#allocation8 + $0xa0] sm:$0xff]
    %v280 = vld [vmem:[#allocation8 + $0xa8] sm:$0xff]
    %v281 = vld [vmem:[#allocation8 + $0xb0] sm:$0xff]
    %v282 = vld [vmem:[#allocation8 + $0xb8] sm:$0xff]
    %v283 = vld [vmem:[#allocation8 + $0xc0] sm:$0xff]
    %v284 = vld [vmem:[#allocation8 + $0xc8] sm:$0xff]
    %v285 = vld [vmem:[#allocation8 + $0xd0] sm:$0xff]
    %v286 = vld [vmem:[#allocation8 + $0xd8] sm:$0xff]
    %v287 = vld [vmem:[#allocation8 + $0xe0] sm:$0xff]
    %v288 = vld [vmem:[#allocation8 + $0xe8] sm:$0xff]
    %v289 = vld [vmem:[#allocation8 + $0xf0] sm:$0xff]
    %v290 = vld [vmem:[#allocation8 + $0xf8] sm:$0xff]
    %v291 = vld [vmem:[%s6] sm:$0x3]
    %v293 = vlaneseq
    %v294 = vshrl.u32 %v293, 7
    %v295 = vsub.s32 0, %v294
    %v296 = vrot.slane %v291, %v295
    %v297 = vlaneseq
    %v298 = vshrl.u32 %v297, 7
    %v299 = vsub.s32 1, %v298
    %v300 = vrot.slane %v291, %v299
    %303 = vmatprep.subr.mxu0 %v290
    %304 = vmatpush1.msra.mxu0 %v289
    %305 = vmatprep.subr.mxu0 %v288
    %306 = vmatpush1.msra.mxu0 %v287
    %307 = vmatprep.subr.mxu0 %v286
    %308 = vmatpush1.msra.mxu0 %v285
    %309 = vmatprep.subr.mxu0 %v284
    %310 = vmatpush1.msra.mxu0 %v283
    %311 = vmatprep.subr.mxu0 %v282
    %312 = vmatpush1.msra.mxu0 %v281
    %313 = vmatprep.subr.mxu0 %v280
    %314 = vmatpush1.msra.mxu0 %v279
    %315 = vmatprep.subr.mxu0 %v278
    %316 = vmatpush1.msra.mxu0 %v277
    %317 = vmatprep.subr.mxu0 %v276
    %318 = vmatpush1.msra.mxu0 %v275
    %319 = vmatprep.subr.mxu0 %v274
    %320 = vmatpush1.msra.mxu0 %v273
    %321 = vmatprep.subr.mxu0 %v272
    %322 = vmatpush1.msra.mxu0 %v271
    %323 = vmatprep.subr.mxu0 %v270
    %324 = vmatpush1.msra.mxu0 %v269
    %325 = vmatprep.subr.mxu0 %v268
    %326 = vmatpush1.msra.mxu0 %v267
    %327 = vmatprep.subr.mxu0 %v266
    %328 = vmatpush1.msra.mxu0 %v265
    %329 = vmatprep.subr.mxu0 %v264
    %330 = vmatpush1.msra.mxu0 %v263
    %331 = vmatprep.subr.mxu0 %v262
    %332 = vmatpush1.msra.mxu0 %v261
    %333 = vmatprep.subr.mxu0 %v260
    %334 = vmatpush1.msra.mxu0 %v259
    %335 = vmatprep.subr.mxu0 0.0
    %336 = vmatpush2.msra.mxu0 0.0
    %337 = vmatprep.subr.mxu0 0.0
    %338 = vmatpush2.msra.mxu0 0.0
    %339 = vmatprep.subr.mxu0 0.0
    %340 = vmatpush2.msra.mxu0 0.0
    %341 = vmatprep.subr.mxu0 0.0
    %342 = vmatpush2.msra.mxu0 0.0
    %343 = vmatprep.subr.mxu0 0.0
    %344 = vmatpush2.msra.mxu0 0.0
    %345 = vmatprep.subr.mxu0 0.0
    %346 = vmatpush2.msra.mxu0 0.0
    %347 = vmatprep.subr.mxu0 0.0
    %348 = vmatpush2.msra.mxu0 0.0
    %349 = vmatprep.subr.mxu0 0.0
    %350 = vmatpush2.msra.mxu0 0.0
    %351 = vmatprep.subr.mxu0 0.0
    %352 = vmatpush2.msra.mxu0 0.0
    %353 = vmatprep.subr.mxu0 0.0
    %354 = vmatpush2.msra.mxu0 0.0
    %355 = vmatprep.subr.mxu0 0.0
    %356 = vmatpush2.msra.mxu0 0.0
    %357 = vmatprep.subr.mxu0 0.0
    %358 = vmatpush2.msra.mxu0 0.0
    %359 = vmatprep.subr.mxu0 0.0
    %360 = vmatpush2.msra.mxu0 0.0
    %361 = vmatprep.subr.mxu0 0.0
    %362 = vmatpush2.msra.mxu0 0.0
    %363 = vmatprep.subr.mxu0 0.0
    %364 = vmatpush2.msra.mxu0 0.0
    %365 = vmatprep.subr.mxu0 0.0
    %366 = vmatpush2.msra.mxu0 0.0
    %367 = vmatprep.mubr.f32.mxu0 0.0
    %368 = vmatmul.mubr.f32.gmra.mxu0 %v258
    %v369 = vpop.f32.mrf.mxu0
    %v370 = vadd.f32 %v296, %v369
    %v371 = vpop.f32.mrf.mxu0
    %v372 = vadd.f32 %v300, %v371
    %373 = vdwg.mxu0
    %374 = vst [vmem:[#allocation10] sm:$0xff] %v370
    %375 = vst [vmem:[#allocation11] sm:$0xff] %v372
    // Predicated region
    $region46: #{tpu_custom_call.1} parent=1 // pred_check
      _
    $region47: #{tpu_custom_call.1} parent=1 // pred_check_branch
      %377 = sbr.rel (0) target = $region49
    $region48: #{tpu_custom_call.1} parent=1 // pred_region
      %s379 = ssub.s32 128, 128
      %380 = vsyncadd [#allocation4], %s379
      %s382 = sshll.u32 [#allocation10], 4
      %s383 = int_to_ptr.vmem [resolvable:$true] %s382
      %385 = dma.vmem_to_hbm [thread:$0]  %s383, 128, %s7, [#allocation4]
    $region49: #{tpu_custom_call.1} parent=1 // pred_fallthru
      _
    // Predicated region
    $region50: #{tpu_custom_call.1} parent=1 // pred_check
      _
    $region51: #{tpu_custom_call.1} parent=1 // pred_check_branch
      %387 = sbr.rel (0) target = $region53
    $region52: #{tpu_custom_call.1} parent=1 // pred_region
      %s389 = ssub.s32 128, 128
      %390 = vsyncadd [#allocation12], %s389
      %s392 = sshll.u32 [#allocation11], 4
      %s393 = int_to_ptr.vmem [resolvable:$true] %s392
      %395 = dma.vmem_to_hbm [thread:$0]  %s393, 128, %s8, [#allocation12]
    $region53: #{tpu_custom_call.1} parent=1 // pred_fallthru
      _
    // Predicated region
    $region54: #{tpu_custom_call.1} parent=1 // pred_check
      _
    $region55: #{tpu_custom_call.1} parent=1 // pred_check_branch
      %397 = sbr.rel (0) target = $region57
    $region56: #{tpu_custom_call.1} parent=1 // pred_region
      %398 = dma.done [#allocation4], 128
    $region57: #{tpu_custom_call.1} parent=1 // pred_fallthru
      _
    // Predicated region
    $region58: #{tpu_custom_call.1} parent=1 // pred_check
      _
    $region59: #{tpu_custom_call.1} parent=1 // pred_check_branch
      %400 = sbr.rel (0) target = $region61
    $region60: #{tpu_custom_call.1} parent=1 // pred_region
      %401 = dma.done [#allocation12], 128
    $region61: #{tpu_custom_call.1} parent=1 // pred_fallthru
      _
    %402 = vsyncpa [#allocation3], 1
    %403 = vsyncpa [#allocation6], 1
    %404 = vsyncpa [#allocation9], 1
    %405 = vsyncpa [#allocation4], 1
    %406 = vsyncpa [#allocation12], 1

</llo_original>
